<compile_context>
chip_gen: v7x
topology: tpu7x:2x2x1
jax: 0.10.0
libtpu: 0.0.40
codegen_flags: <defaults>
</compile_context>

<pallas_src>
from functools import partial

import jax
import jax.numpy as jnp
from jax.experimental import pallas as pl
from jax.experimental.pallas import tpu as pltpu


def _round_up(x: int, m: int) -> int:
    return (x + m - 1) // m * m


def _make_ctc_kernel(blank: int, tile_t: int):
    def ctc_kernel(em_ref, out_ref, carry_ref):
        # em_ref   : [C, TILE_T]  (classes on sublanes, time on lanes)
        # out_ref  : [1, TILE_T]  int32 -- argmax class id, or -1 for dropped timesteps
        # carry_ref: SMEM (1,)    int32 -- last argmax of the previous tile
        @pl.when(pl.program_id(0) == 0)
        def _():
            # Sentinel that never equals a valid class id => first timestep always
            # survives the unique_consecutive collapse.
            carry_ref[0] = jnp.int32(-1)

        em = em_ref[...]
        C = em.shape[0]

        # argmax over the class (sublane) axis, first-occurrence tie-break
        # (matches torch.argmax semantics).
        m = jnp.max(em, axis=0, keepdims=True)                          # [1, TILE_T]
        cls = jax.lax.broadcasted_iota(jnp.int32, (C, tile_t), 0)
        cand = jnp.where(em == m, cls, jnp.int32(C))                    # sentinel = C
        idx = jnp.min(cand, axis=0, keepdims=True)                      # [1, TILE_T]
        idx = jnp.minimum(idx, jnp.int32(C - 1))                        # all-NaN column guard

        # Previous timestep's argmax: lane roll (XLU, free slot); lane 0 patched
        # from the SMEM carry of the previous tile.
        lane = jax.lax.broadcasted_iota(jnp.int32, (1, tile_t), 1)
        prev = pltpu.roll(idx, shift=1, axis=1)
        prev = jnp.where(lane == 0, carry_ref[0], prev)

        # unique_consecutive + drop blanks, merged into one lane-dense output.
        keep = jnp.logical_and(idx != prev, idx != jnp.int32(blank))
        out_ref[...] = jnp.where(keep, idx, jnp.int32(-1))

        # Carry this tile's last argmax to the next (sequential) grid step.
        carry_ref[0] = jnp.max(jnp.where(lane == tile_t - 1, idx, jnp.int32(-1)))

    return ctc_kernel


@partial(jax.jit, static_argnames=("blank", "tile_t"))
def greedy_ctc_indices(emission: jax.Array, blank: int = 0, tile_t: int = 512) -> jax.Array:
    """Runs the Pallas kernel.

    Returns a [T] int32 device array: the argmax class id for timesteps that
    survive unique_consecutive + blank-drop, and -1 for dropped timesteps.
    """
    T, C = emission.shape
    tile_t = min(tile_t, _round_up(T, 128))        # lane-aligned tile, no oversizing tiny T
    T_pad = _round_up(T, tile_t)

    # Wrapper-side layout plumbing: time onto the lane axis, classes onto sublanes.
    em_t = jnp.transpose(emission)                 # [C, T]
    if T_pad != T:
        em_t = jnp.pad(em_t, ((0, 0), (0, T_pad - T)))   # pad tail; sliced off below

    grid = (T_pad // tile_t,)

    # Explicit VMEM budget: 2x double-buffered blocks + in-kernel temporaries +
    # headroom; kept well under every generation's scoped limit (v7x: 64 MiB physical).
    itemsize = jnp.dtype(emission.dtype).itemsize
    in_block = C * tile_t * itemsize
    out_block = tile_t * 4
    temps = 4 * C * tile_t * 4                     # cand / iota / mask temporaries
    vmem_limit = int(min(max(2 * (in_block + out_block) + temps + (1 << 20), 4 << 20),
                         32 << 20))

    out = pl.pallas_call(
        _make_ctc_kernel(blank, tile_t),
        out_shape=jax.ShapeDtypeStruct((1, T_pad), jnp.int32),
        grid=grid,
        in_specs=[pl.BlockSpec((C, tile_t), lambda i: (0, i))],
        out_specs=pl.BlockSpec((1, tile_t), lambda i: (0, i)),
        scratch_shapes=[pltpu.SMEM((1,), jnp.int32)],
        compiler_params=pltpu.CompilerParams(
            dimension_semantics=("arbitrary",),    # sequential: SMEM carry couples tiles
            vmem_limit_bytes=vmem_limit,
        ),
    )(em_t)
    return out[0, :T]


def greedy_ctc_decode(emission: jax.Array, labels, blank: int = 0, tile_t: int = 512) -> str:
    """Full GreedyCTCDecoder.forward: kernel for compute, Python only for the join."""
    merged = greedy_ctc_indices(emission, blank=blank, tile_t=tile_t)
    merged = jax.device_get(merged)                # single device->host transfer
    # TODO(synk): the ''.join over labels (string construction) has no device/Pallas
    # equivalent; it stays host-side by necessity.
    return ''.join(labels[int(i)] for i in merged if i >= 0)


def _reference_decode(emission, labels, blank=0):
    """Plain-JAX/Python reference mirroring the PyTorch module exactly."""
    indices = [int(i) for i in jnp.argmax(emission, axis=-1)]
    uniq = [indices[0]] + [b for a, b in zip(indices, indices[1:]) if b != a]
    return ''.join(labels[i] for i in uniq if i != blank)


if __name__ == "__main__":
    C = 32
    labels = ['-'] + [chr(ord('a') + i) for i in range(C - 1)]   # labels[0] = blank
    blank = 0

    key = jax.random.PRNGKey(0)
    k1, k2 = jax.random.split(key)

    # 1) Module-sized example: seq=8 timesteps, 32 classes.
    emission = jax.random.normal(k1, (8, C), dtype=jnp.float32)
    out = greedy_ctc_indices(emission, blank=blank)
    jax.block_until_ready(out)
    decoded = greedy_ctc_decode(emission, labels, blank=blank)
    expected = _reference_decode(emission, labels, blank=blank)
    assert decoded == expected, f"mismatch: kernel={decoded!r} ref={expected!r}"

    # 2) Multi-tile case exercising the SMEM carry across the tile boundary
    #    (rows 127/128 are identical, straddling the 128-lane tile edge).
    em2 = jax.random.normal(k2, (300, C), dtype=jnp.float32)
    em2 = em2.at[128].set(em2[127])
    decoded2 = greedy_ctc_decode(em2, labels, blank=blank, tile_t=128)
    expected2 = _reference_decode(em2, labels, blank=blank)
    assert decoded2 == expected2, f"mismatch: kernel={decoded2!r} ref={expected2!r}"

    # 3) bf16 emissions pass through without a forced upcast.
    em3 = jax.random.normal(k1, (300, C), dtype=jnp.bfloat16)
    decoded3 = greedy_ctc_decode(em3, labels, blank=blank)
    expected3 = _reference_decode(em3.astype(jnp.float32), labels, blank=blank)
    assert decoded3 == expected3, f"mismatch: kernel={decoded3!r} ref={expected3!r}"

    print("KERNEL_OK")
</pallas_src>

<mosaic_0001>
module attributes {stable_mosaic.version = 11 : i64} {
  func.func @ctc_kernel(%arg0: i32, %arg1: memref<32x128xf32, #tpu.memory_space<vmem>>, %arg2: memref<1x128xi32, #tpu.memory_space<vmem>>, %arg3: memref<1xi32, #tpu.memory_space<smem>>) attributes {dimension_semantics = [#tpu.dimension_semantics<arbitrary>], iteration_bounds = array<i64: 1>, scalar_prefetch = 0 : i64, scratch_operands = 1 : i64, tpu.core_type = #tpu.core_type<tc>, window_params = [{transform_indices = @transform_0, window_bounds = array<i64: 32, 128>}, {transform_indices = @transform_1, window_bounds = array<i64: 1, 128>}]} {
    %c0_i32 = arith.constant 0 : i32
    %0 = arith.cmpi eq, %arg0, %c0_i32 : i32
    %1 = arith.extui %0 : i1 to i32
    %c0_i32_0 = arith.constant 0 : i32
    %2 = arith.cmpi ne, %1, %c0_i32_0 : i32
    scf.if %2 {
      %c-1_i32_11 = arith.constant -1 : i32
      %c0_12 = arith.constant 0 : index
      %38 = memref.load %arg3[%c0_12] : memref<1xi32, #tpu.memory_space<smem>>
      memref.store %c-1_i32_11, %arg3[%c0_12] : memref<1xi32, #tpu.memory_space<smem>>
    } else {
    }
    %c0 = arith.constant 0 : index
    %c0_1 = arith.constant 0 : index
    %3 = vector.load %arg1[%c0, %c0_1] : memref<32x128xf32, #tpu.memory_space<vmem>>, vector<32x128xf32>
    %cst = arith.constant dense<0xFF800000> : vector<128xf32>
    %4 = vector.multi_reduction <maximumf>, %3, %cst [0] : vector<32x128xf32> to vector<128xf32>
    %5 = vector.shape_cast %4 : vector<128xf32> to vector<1x128xf32>
    %6 = tpu.iota {dimensions = array<i32: 0>} : vector<32x128xi32>
    %7 = vector.broadcast %5 : vector<1x128xf32> to vector<32x128xf32>
    %8 = arith.cmpf oeq, %3, %7 : vector<32x128xf32>
    %c32_i32 = arith.constant 32 : i32
    %9 = vector.broadcast %c32_i32 : i32 to vector<32x128xi32>
    %10 = arith.select %8, %6, %9 : vector<32x128xi1>, vector<32x128xi32>
    %cst_2 = arith.constant dense<2147483647> : vector<128xi32>
    %11 = vector.multi_reduction <minsi>, %10, %cst_2 [0] : vector<32x128xi32> to vector<128xi32>
    %12 = vector.shape_cast %11 : vector<128xi32> to vector<1x128xi32>
    %c31_i32 = arith.constant 31 : i32
    %13 = vector.broadcast %c31_i32 : i32 to vector<1x128xi32>
    %14 = arith.minsi %12, %13 : vector<1x128xi32>
    %15 = tpu.iota {dimensions = array<i32: 1>} : vector<1x128xi32>
    %c1_i32 = arith.constant 1 : i32
    %16 = tpu.dynamic_rotate %14 by %c1_i32 dim 1 : vector<1x128xi32>, i32 -> vector<1x128xi32>
    %c0_i32_3 = arith.constant 0 : i32
    %17 = vector.broadcast %c0_i32_3 : i32 to vector<1x128xi32>
    %18 = arith.cmpi eq, %15, %17 : vector<1x128xi32>
    %c0_4 = arith.constant 0 : index
    %19 = memref.load %arg3[%c0_4] : memref<1xi32, #tpu.memory_space<smem>>
    %20 = vector.broadcast %19 : i32 to vector<1x128xi32>
    %21 = arith.select %18, %20, %16 : vector<1x128xi1>, vector<1x128xi32>
    %22 = arith.cmpi ne, %14, %21 : vector<1x128xi32>
    %c0_i32_5 = arith.constant 0 : i32
    %23 = vector.broadcast %c0_i32_5 : i32 to vector<1x128xi32>
    %24 = arith.cmpi ne, %14, %23 : vector<1x128xi32>
    %25 = arith.andi %22, %24 : vector<1x128xi1>
    %c-1_i32 = arith.constant -1 : i32
    %26 = vector.broadcast %c-1_i32 : i32 to vector<1x128xi32>
    %27 = arith.select %25, %14, %26 : vector<1x128xi1>, vector<1x128xi32>
    %c0_6 = arith.constant 0 : index
    %c0_7 = arith.constant 0 : index
    %28 = vector.load %arg2[%c0_6, %c0_7] : memref<1x128xi32, #tpu.memory_space<vmem>>, vector<1x128xi32>
    tpu.vector_store %arg2[%c0_6, %c0_7], %27 {strides = array<i32>} : memref<1x128xi32, #tpu.memory_space<vmem>>, vector<1x128xi32>,
    %c127_i32 = arith.constant 127 : i32
    %29 = vector.broadcast %c127_i32 : i32 to vector<1x128xi32>
    %30 = arith.cmpi eq, %15, %29 : vector<1x128xi32>
    %c-1_i32_8 = arith.constant -1 : i32
    %31 = vector.broadcast %c-1_i32_8 : i32 to vector<1x128xi32>
    %32 = arith.select %30, %14, %31 : vector<1x128xi1>, vector<1x128xi32>
    %33 = vector.shape_cast %32 : vector<1x128xi32> to vector<1x1x128xi32>
    %cst_9 = arith.constant dense<-2147483648> : vector<1xi32>
    %34 = vector.multi_reduction <maxsi>, %33, %cst_9 [1, 2] : vector<1x1x128xi32> to vector<1xi32>
    %35 = vector.shape_cast %34 : vector<1xi32> to vector<1x1x1xi32>
    %36 = vector.extract %35[0, 0, 0] : i32 from vector<1x1x1xi32>
    %c0_10 = arith.constant 0 : index
    %37 = memref.load %arg3[%c0_10] : memref<1xi32, #tpu.memory_space<smem>>
    memref.store %36, %arg3[%c0_10] : memref<1xi32, #tpu.memory_space<smem>>
    return
  }
  func.func @transform_0(%arg0: i32) -> (i32, i32) {
    %c0_i32 = arith.constant 0 : i32
    %c0_i32_0 = arith.constant 0 : i32
    return %c0_i32, %arg0 : i32, i32
  }
  func.func @transform_1(%arg0: i32) -> (i32, i32) {
    %c0_i32 = arith.constant 0 : i32
    %c0_i32_0 = arith.constant 0 : i32
    return %c0_i32, %arg0 : i32, i32
  }
}

</mosaic_0001>

<llo_original>
// kernel: greedy_ctc_indices.1
$region0: #{greedy_ctc_indices.1}
  #allocation0 [shape = 'u32[]', space=smem, size = 0x4, offset = 0x4, fixed_abs, tag = 'smem constant byte address 0x4 - core index']
  #allocation1 [shape = 'u32[144,128]{1,0:T(1,128)}', space=vmem, size = 0x12000, scoped, tag = 'internal scratch']
  #allocation2 [shape = 's32[1]{0:T(128)}', space=smem, size = 0x200, scoped, tag = 'scratch operand']
  %s0 = inlined_call_operand.vmem [shape: f32[32,128], index: 0, kind: input, shape index: {}]
  %s1 = inlined_call_operand.vmem [shape: s32[1,128], index: 1, kind: output, shape index: {}]
  %s2 = sld [smem:[#allocation0]]
  $region18: #{greedy_ctc_indices.1} parent=0
    _
  %s4 = ssub.s32 1, %s2
  %s5 = scalar_select 0, %s4, %s2
  // Predicated region
  $region2: #{greedy_ctc_indices.1} parent=0 // pred_check
    _
  $region3: #{greedy_ctc_indices.1} parent=0 // pred_check_branch
    %7 = sbr.rel (0) target = $region5
  $region4: #{greedy_ctc_indices.1} parent=0 // pred_region
    _
  $region5: #{greedy_ctc_indices.1} parent=0 // pred_fallthru
    _
  %p8 = scmp.eq.s32.totalorder 0, 0
  // Predicated region
  $region6: #{greedy_ctc_indices.1} parent=0 // pred_check
    %p9 = pneg %p8
  $region7: #{greedy_ctc_indices.1} parent=0 // pred_check_branch
    %11 = sbr.rel (%p9) target = $region9
  $region8: #{greedy_ctc_indices.1} parent=0 // pred_region
    %s12 = scalar_lea.smem [#allocation2], 0
    %13 = sst [smem:[%s12]] 4294967295
  $region9: #{greedy_ctc_indices.1} parent=0 // pred_fallthru
    _
  %v14 = vld [vmem:[%s0] sm:$0xff]
  %v15 = vld [vmem:[%s0 + $0x8] sm:$0xff]
  %v16 = vld [vmem:[%s0 + $0x10] sm:$0xff]
  %v17 = vld [vmem:[%s0 + $0x18] sm:$0xff]
  %v18 = vmax.f32 %v14, %v15
  %v19 = vmax.f32 %v16, %v17
  %v20 = vmax.f32 %v18, %v19
  %v21 = vrot.slane %v20, 4
  %v22 = vmax.f32 %v20, %v21
  %v23 = vrot.slane %v22, 2
  %v24 = vmax.f32 %v22, %v23
  %v25 = vrot.slane %v24, 1
  %v26 = vmax.f32 %v24, %v25
  %v27 = vlaneseq
  %v28 = vshrl.u32 %v27, 7
  %v29 = vadd.s32 %v28, 8
  %v30 = vadd.s32 %v28, 16
  %v31 = vadd.s32 %v28, 24
  %vm32 = vcmp.eq.f32.partialorder %v14, %v26
  %vm33 = vcmp.eq.f32.partialorder %v15, %v26
  %vm34 = vcmp.eq.f32.partialorder %v16, %v26
  %vm35 = vcmp.eq.f32.partialorder %v17, %v26
  %v36 = vsel %vm32, %v28, 32
  %v37 = vsel %vm33, %v29, 32
  %v38 = vsel %vm34, %v30, 32
  %v39 = vsel %vm35, %v31, 32
  %vm40 = vcmp.lt.s32.totalorder %v36, %v37
  %v41 = vsel %vm40, %v36, %v37
  %vm42 = vcmp.lt.s32.totalorder %v38, %v39
  %v43 = vsel %vm42, %v38, %v39
  %vm44 = vcmp.lt.s32.totalorder %v41, %v43
  %v45 = vsel %vm44, %v41, %v43
  %v46 = vrot.slane %v45, 4
  %vm47 = vcmp.lt.s32.totalorder %v45, %v46
  %v48 = vsel %vm47, %v45, %v46
  %v49 = vrot.slane %v48, 2
  %vm50 = vcmp.lt.s32.totalorder %v48, %v49
  %v51 = vsel %vm50, %v48, %v49
  %v52 = vrot.slane %v51, 1
  %vm53 = vcmp.lt.s32.totalorder %v51, %v52
  %v54 = vsel %vm53, %v51, %v52
  %vm55 = vcmp.lt.s32.totalorder %v54, 31
  %v56 = vsel %vm55, %v54, 31
  %v57 = vlaneseq
  %v58 = vand.u32 %v57, 127
  %59 = vrot.lane.b32.xlu0 %v56, 1
  %v60 = vpop.permute.xlu0 %59
  %vm61 = vcmp.eq.s32.totalorder %v58, 0
  %s62 = sld [smem:[#allocation2]]
  %v63 = vstv %s62
  %v64 = vsel %vm61, %v63, %v60
  %vm65 = vcmp.ne.s32.totalorder %v56, %v64
  %vm66 = vcmp.ne.s32.totalorder %v56, 0
  %vm67 = vmand %vm65, %vm66
  %v68 = vsel %vm67, %v56, 4294967295
  %69 = vst [vmem:[%s1] sm:$0x1] %v68
  %vm70 = vcmp.eq.s32.totalorder %v58, 127
  %v71 = vsel %vm70, %v56, 4294967295
  %v72 = vand.u32 %v71, 65535
  %v73 = vshra.s32 %v71, 16
  %v74 = vcvt.s32.f32 %v72
  %v75 = vcvt.s32.f32 %v73
  %76 = vmax.xlane.f32.xlu0 %v75
  %v77 = vpop.xlane.xlu0 %76
  %vm78 = vcmp.eq.f32.partialorder %v75, %v77
  %v79 = vsel %vm78, %v74, -inf
  %80 = vmax.xlane.f32.xlu0 %v79
  %v81 = vpop.xlane.xlu0 %80
  %v82 = vcvt.f32.s32 %v81
  %v83 = vcvt.f32.s32 %v77
  %v84 = vshll.u32 %v83, 16
  %v85 = vadd.s32 %v84, %v82
  %s86 = vtos %v85
  %s87 = scalar_lea.smem [#allocation2], 0
  %88 = sst [smem:[%s87]] %s86
  // Predicated region
  $region10: #{greedy_ctc_indices.1} parent=0 // pred_check
    _
  $region11: #{greedy_ctc_indices.1} parent=0 // pred_check_branch
    %90 = sbr.rel (0) target = $region13
  $region12: #{greedy_ctc_indices.1} parent=0 // pred_region
    _
  $region13: #{greedy_ctc_indices.1} parent=0 // pred_fallthru
    _
  // Predicated region
  $region14: #{greedy_ctc_indices.1} parent=0 // pred_check
    _
  $region15: #{greedy_ctc_indices.1} parent=0 // pred_check_branch
    %92 = sbr.rel (0) target = $region17
  $region16: #{greedy_ctc_indices.1} parent=0 // pred_region
    _
  $region17: #{greedy_ctc_indices.1} parent=0 // pred_fallthru
    _

</llo_original>
